<compile_context>
chip_gen: v7x
topology: tpu7x:2x2x1
jax: 0.10.0
libtpu: 0.0.40
codegen_flags: <defaults>
</compile_context>

<pallas_src>
import functools

import jax
import jax.numpy as jnp
from jax.experimental import pallas as pl
from jax.experimental.pallas import tpu as pltpu


def _round_up(x, m):
    return ((x + m - 1) // m) * m


def _mlp_d_kernel(x_ref, w1_ref, b1_ref, w2_ref, b2_ref, w3_ref, b3_ref,
                  w4_ref, b4_ref, o_ref, acc_ref, *, tile_b, batch):
    i = pl.program_id(0)

    @pl.when(i == 0)
    def _():
        acc_ref[...] = jnp.zeros_like(acc_ref)

    # ---- Linear(D, ndh) + ReLU  (bf16 inputs, f32 accumulation) ----
    h = jnp.dot(x_ref[...], w1_ref[...],
                preferred_element_type=jnp.float32) + b1_ref[...]
    h = jnp.maximum(h, 0.0)

    # ---- Linear(ndh, ndh) + ReLU ----
    h = jnp.dot(h.astype(jnp.bfloat16), w2_ref[...],
                preferred_element_type=jnp.float32) + b2_ref[...]
    h = jnp.maximum(h, 0.0)

    # ---- Linear(ndh, ndh) + ReLU ----
    h = jnp.dot(h.astype(jnp.bfloat16), w3_ref[...],
                preferred_element_type=jnp.float32) + b3_ref[...]
    h = jnp.maximum(h, 0.0)

    # ---- Linear(ndh, 1) as a VPU/XLU reduction (avoid an N=1 MXU pass) ----
    logit = jnp.sum(h * w4_ref[...], axis=-1, keepdims=True) + b4_ref[...]

    # Mask rows that are batch padding so they don't pollute the mean.
    row = i * tile_b + jax.lax.broadcasted_iota(jnp.int32, (tile_b, 1), 0)
    logit = jnp.where(row < batch, logit, 0.0)

    # Accumulate the batch sum; output is always the running mean (the output
    # block is resident across the whole grid, so the final value wins).
    acc_ref[...] += jnp.sum(logit, axis=0, keepdims=True)
    o_ref[...] = acc_ref[...] * (1.0 / batch)


def mlp_d_forward(x_nchw, params, *, tile_b=None):
    """x_nchw: (B, nc, isize, isize) float32. Returns shape (1,), like the torch module."""
    w1, b1, w2, b2, w3, b3, w4, b4 = params  # natural (in, out) layout, f32
    B = x_nchw.shape[0]
    D, ndh = w1.shape

    x = x_nchw.reshape(B, -1).astype(jnp.float32)   # same as torch .view(B, D)

    # Lane / sublane padded sizes.
    d_pad = _round_up(D, 128)
    n_pad = _round_up(max(ndh, 128), 128)
    if tile_b is None:
        tile_b = min(512, _round_up(B, 16))
    num_tiles = pl.cdiv(B, tile_b)
    b_pad = num_tiles * tile_b

    # Zero-pad (padding is mathematically inert: padded x cols hit zero weight
    # rows; padded hidden cols have zero weights+bias so ReLU keeps them 0;
    # padded batch rows are masked in-kernel) and cast the streamed/heavy
    # operands to bf16.  Biases stay f32.
    xp = jnp.zeros((b_pad, d_pad), jnp.float32).at[:B, :D].set(x).astype(jnp.bfloat16)
    w1p = jnp.zeros((d_pad, n_pad), jnp.float32).at[:D, :ndh].set(w1).astype(jnp.bfloat16)
    w2p = jnp.zeros((n_pad, n_pad), jnp.float32).at[:ndh, :ndh].set(w2).astype(jnp.bfloat16)
    w3p = jnp.zeros((n_pad, n_pad), jnp.float32).at[:ndh, :ndh].set(w3).astype(jnp.bfloat16)
    b1p = jnp.zeros((1, n_pad), jnp.float32).at[:, :ndh].set(b1)
    b2p = jnp.zeros((1, n_pad), jnp.float32).at[:, :ndh].set(b2)
    b3p = jnp.zeros((1, n_pad), jnp.float32).at[:, :ndh].set(b3)
    w4p = jnp.zeros((1, n_pad), jnp.float32).at[0, :ndh].set(w4[:, 0])
    b4p = jnp.asarray(b4, jnp.float32).reshape(1, 1)

    const = lambda i: (0, 0)
    out = pl.pallas_call(
        functools.partial(_mlp_d_kernel, tile_b=tile_b, batch=B),
        out_shape=jax.ShapeDtypeStruct((1, 1), jnp.float32),
        grid_spec=pltpu.PrefetchScalarGridSpec(
            num_scalar_prefetch=0,
            grid=(num_tiles,),
            in_specs=[
                pl.BlockSpec((tile_b, d_pad), lambda i: (i, 0)),  # x: streamed per tile
                pl.BlockSpec((d_pad, n_pad), const),              # w1 (resident)
                pl.BlockSpec((1, n_pad), const),                  # b1
                pl.BlockSpec((n_pad, n_pad), const),              # w2
                pl.BlockSpec((1, n_pad), const),                  # b2
                pl.BlockSpec((n_pad, n_pad), const),              # w3
                pl.BlockSpec((1, n_pad), const),                  # b3
                pl.BlockSpec((1, n_pad), const),                  # w4 as a row
                pl.BlockSpec((1, 1), const),                      # b4
            ],
            out_specs=pl.BlockSpec((1, 1), const),
            scratch_shapes=[pltpu.VMEM((1, 1), jnp.float32)],
        ),
        compiler_params=pltpu.CompilerParams(
            # Output block is accumulated across the batch axis -> "arbitrary".
            dimension_semantics=("arbitrary",),
            vmem_limit_bytes=32 * 1024 * 1024,
        ),
    )(xp, w1p, b1p, w2p, b2p, w3p, b3p, w4p, b4p)

    return out.reshape(1)


def init_params(key, D, ndh):
    """Mimics nn.Linear default init (uniform +/- 1/sqrt(fan_in)); (in, out) layout."""
    ks = jax.random.split(key, 8)

    def linear(kw, kb, fan_in, fan_out):
        bound = 1.0 / jnp.sqrt(fan_in)
        w = jax.random.uniform(kw, (fan_in, fan_out), jnp.float32, -bound, bound)
        b = jax.random.uniform(kb, (1, fan_out), jnp.float32, -bound, bound)
        return w, b

    w1, b1 = linear(ks[0], ks[1], D, ndh)
    w2, b2 = linear(ks[2], ks[3], ndh, ndh)
    w3, b3 = linear(ks[4], ks[5], ndh, ndh)
    w4, b4 = linear(ks[6], ks[7], ndh, 1)
    return (w1, b1, w2, b2, w3, b3, w4, b4)


def reference_forward(x_nchw, params, *, emulate_bf16=False):
    """Pure-JAX reference (f32, or emulating the kernel's bf16 inputs)."""
    (w1, b1, w2, b2, w3, b3, w4, b4) = params
    cast = (lambda a: a.astype(jnp.bfloat16)) if emulate_bf16 else (lambda a: a)
    x = x_nchw.reshape(x_nchw.shape[0], -1)
    h = jnp.maximum(jnp.dot(cast(x), cast(w1), preferred_element_type=jnp.float32) + b1, 0.0)
    h = jnp.maximum(jnp.dot(cast(h), cast(w2), preferred_element_type=jnp.float32) + b2, 0.0)
    h = jnp.maximum(jnp.dot(cast(h), cast(w3), preferred_element_type=jnp.float32) + b3, 0.0)
    out = jnp.sum(h * w4[:, 0][None, :], axis=-1, keepdims=True) + b4
    return jnp.mean(out, axis=0).reshape(1)


if __name__ == "__main__":
    # Small shapes consistent with the module: batch=2, nc=4, isize=16, ndh=32.
    B, nc, isize, ndh = 2, 4, 16, 32
    D = nc * isize * isize  # 1024

    key = jax.random.PRNGKey(0)
    k_x, k_p = jax.random.split(key)
    x = jax.random.normal(k_x, (B, nc, isize, isize), jnp.float32)
    params = init_params(k_p, D, ndh)

    out = jax.block_until_ready(mlp_d_forward(x, params))
    assert out.shape == (1,)

    # Tight check against a reference that emulates the kernel's bf16 inputs,
    # loose check against the pure-f32 torch-equivalent reference.
    ref_bf16 = reference_forward(x, params, emulate_bf16=True)
    ref_f32 = reference_forward(x, params, emulate_bf16=False)
    assert jnp.allclose(out, ref_bf16, atol=2e-3, rtol=2e-3), (out, ref_bf16)
    assert jnp.allclose(out, ref_f32, atol=5e-2, rtol=5e-2), (out, ref_f32)

    print("KERNEL_OK")
</pallas_src>

<mosaic_0001>
module attributes {stable_mosaic.version = 11 : i64} {
  func.func @_mlp_d_kernel(%arg0: i32, %arg1: memref<16x1024xbf16, #tpu.memory_space<vmem>>, %arg2: memref<1024x128xbf16, #tpu.memory_space<vmem>>, %arg3: memref<1x128xf32, #tpu.memory_space<vmem>>, %arg4: memref<128x128xbf16, #tpu.memory_space<vmem>>, %arg5: memref<1x128xf32, #tpu.memory_space<vmem>>, %arg6: memref<128x128xbf16, #tpu.memory_space<vmem>>, %arg7: memref<1x128xf32, #tpu.memory_space<vmem>>, %arg8: memref<1x128xf32, #tpu.memory_space<vmem>>, %arg9: memref<1x1xf32, #tpu.memory_space<vmem>>, %arg10: memref<1x1xf32, #tpu.memory_space<vmem>>, %arg11: memref<1x1xf32, #tpu.memory_space<vmem>>) attributes {dimension_semantics = [#tpu.dimension_semantics<arbitrary>], iteration_bounds = array<i64: 1>, scalar_prefetch = 0 : i64, scratch_operands = 1 : i64, tpu.core_type = #tpu.core_type<tc>, window_params = [{transform_indices = @transform_0, window_bounds = array<i64: 16, 1024>}, {pipeline_mode = #tpu.pipeline_mode<synchronous>, transform_indices = @transform_1, window_bounds = array<i64: 1024, 128>}, {pipeline_mode = #tpu.pipeline_mode<synchronous>, transform_indices = @transform_2, window_bounds = array<i64: 1, 128>}, {pipeline_mode = #tpu.pipeline_mode<synchronous>, transform_indices = @transform_3, window_bounds = array<i64: 128, 128>}, {pipeline_mode = #tpu.pipeline_mode<synchronous>, transform_indices = @transform_4, window_bounds = array<i64: 1, 128>}, {pipeline_mode = #tpu.pipeline_mode<synchronous>, transform_indices = @transform_5, window_bounds = array<i64: 128, 128>}, {pipeline_mode = #tpu.pipeline_mode<synchronous>, transform_indices = @transform_6, window_bounds = array<i64: 1, 128>}, {pipeline_mode = #tpu.pipeline_mode<synchronous>, transform_indices = @transform_7, window_bounds = array<i64: 1, 128>}, {pipeline_mode = #tpu.pipeline_mode<synchronous>, transform_indices = @transform_8, window_bounds = array<i64: 1, 1>}, {pipeline_mode = #tpu.pipeline_mode<synchronous>, transform_indices = @transform_9, window_bounds = array<i64: 1, 1>}]} {
    %c0_i32 = arith.constant 0 : i32
    %0 = arith.cmpi eq, %arg0, %c0_i32 : i32
    %1 = arith.extui %0 : i1 to i32
    %c0_i32_0 = arith.constant 0 : i32
    %2 = arith.cmpi ne, %1, %c0_i32_0 : i32
    scf.if %2 {
      %cst_35 = arith.constant 0.000000e+00 : f32
      %52 = vector.broadcast %cst_35 : f32 to vector<1x1xf32>
      %c0_36 = arith.constant 0 : index
      %c0_37 = arith.constant 0 : index
      %53 = vector.load %arg11[%c0_36, %c0_37] : memref<1x1xf32, #tpu.memory_space<vmem>>, vector<1x1xf32>
      tpu.vector_store %arg11[%c0_36, %c0_37], %52 {strides = array<i32>} : memref<1x1xf32, #tpu.memory_space<vmem>>, vector<1x1xf32>,
    } else {
    }
    %c0 = arith.constant 0 : index
    %c0_1 = arith.constant 0 : index
    %3 = vector.load %arg1[%c0, %c0_1] : memref<16x1024xbf16, #tpu.memory_space<vmem>>, vector<16x1024xbf16>
    %c0_2 = arith.constant 0 : index
    %c0_3 = arith.constant 0 : index
    %4 = vector.load %arg2[%c0_2, %c0_3] : memref<1024x128xbf16, #tpu.memory_space<vmem>>, vector<1024x128xbf16>
    %cst = arith.constant dense<0.000000e+00> : vector<16x128xf32>
    %5 = tpu.matmul %3, %4, %cst {dimension_numbers = #tpu.dot_dimension_numbers<[1], [0], [0], [1], [0, 0, 1, 1], [], []>} : vector<16x1024xbf16>, vector<1024x128xbf16>, vector<16x128xf32> -> vector<16x128xf32>
    %c0_4 = arith.constant 0 : index
    %c0_5 = arith.constant 0 : index
    %6 = vector.load %arg3[%c0_4, %c0_5] : memref<1x128xf32, #tpu.memory_space<vmem>>, vector<1x128xf32>
    %7 = vector.broadcast %6 : vector<1x128xf32> to vector<16x128xf32>
    %8 = arith.addf %5, %7 : vector<16x128xf32>
    %cst_6 = arith.constant 0.000000e+00 : f32
    %9 = vector.broadcast %cst_6 : f32 to vector<16x128xf32>
    %10 = arith.maximumf %8, %9 : vector<16x128xf32>
    %11 = arith.truncf %10 : vector<16x128xf32> to vector<16x128xbf16>
    %c0_7 = arith.constant 0 : index
    %c0_8 = arith.constant 0 : index
    %12 = vector.load %arg4[%c0_7, %c0_8] : memref<128x128xbf16, #tpu.memory_space<vmem>>, vector<128x128xbf16>
    %cst_9 = arith.constant dense<0.000000e+00> : vector<16x128xf32>
    %13 = tpu.matmul %11, %12, %cst_9 {dimension_numbers = #tpu.dot_dimension_numbers<[1], [0], [0], [1], [0, 0, 1, 1], [], []>} : vector<16x128xbf16>, vector<128x128xbf16>, vector<16x128xf32> -> vector<16x128xf32>
    %c0_10 = arith.constant 0 : index
    %c0_11 = arith.constant 0 : index
    %14 = vector.load %arg5[%c0_10, %c0_11] : memref<1x128xf32, #tpu.memory_space<vmem>>, vector<1x128xf32>
    %15 = vector.broadcast %14 : vector<1x128xf32> to vector<16x128xf32>
    %16 = arith.addf %13, %15 : vector<16x128xf32>
    %cst_12 = arith.constant 0.000000e+00 : f32
    %17 = vector.broadcast %cst_12 : f32 to vector<16x128xf32>
    %18 = arith.maximumf %16, %17 : vector<16x128xf32>
    %19 = arith.truncf %18 : vector<16x128xf32> to vector<16x128xbf16>
    %c0_13 = arith.constant 0 : index
    %c0_14 = arith.constant 0 : index
    %20 = vector.load %arg6[%c0_13, %c0_14] : memref<128x128xbf16, #tpu.memory_space<vmem>>, vector<128x128xbf16>
    %cst_15 = arith.constant dense<0.000000e+00> : vector<16x128xf32>
    %21 = tpu.matmul %19, %20, %cst_15 {dimension_numbers = #tpu.dot_dimension_numbers<[1], [0], [0], [1], [0, 0, 1, 1], [], []>} : vector<16x128xbf16>, vector<128x128xbf16>, vector<16x128xf32> -> vector<16x128xf32>
    %c0_16 = arith.constant 0 : index
    %c0_17 = arith.constant 0 : index
    %22 = vector.load %arg7[%c0_16, %c0_17] : memref<1x128xf32, #tpu.memory_space<vmem>>, vector<1x128xf32>
    %23 = vector.broadcast %22 : vector<1x128xf32> to vector<16x128xf32>
    %24 = arith.addf %21, %23 : vector<16x128xf32>
    %cst_18 = arith.constant 0.000000e+00 : f32
    %25 = vector.broadcast %cst_18 : f32 to vector<16x128xf32>
    %26 = arith.maximumf %24, %25 : vector<16x128xf32>
    %c0_19 = arith.constant 0 : index
    %c0_20 = arith.constant 0 : index
    %27 = vector.load %arg8[%c0_19, %c0_20] : memref<1x128xf32, #tpu.memory_space<vmem>>, vector<1x128xf32>
    %28 = vector.broadcast %27 : vector<1x128xf32> to vector<16x128xf32>
    %29 = arith.mulf %26, %28 : vector<16x128xf32>
    %cst_21 = arith.constant dense<0.000000e+00> : vector<16xf32>
    %30 = vector.multi_reduction <add>, %29, %cst_21 [1] : vector<16x128xf32> to vector<16xf32>
    %31 = vector.shape_cast %30 : vector<16xf32> to vector<16x1xf32>
    %c0_22 = arith.constant 0 : index
    %c0_23 = arith.constant 0 : index
    %32 = vector.load %arg9[%c0_22, %c0_23] : memref<1x1xf32, #tpu.memory_space<vmem>>, vector<1x1xf32>
    %33 = vector.broadcast %32 : vector<1x1xf32> to vector<16x1xf32>
    %34 = arith.addf %31, %33 : vector<16x1xf32>
    %c16_i32 = arith.constant 16 : i32
    %35 = arith.muli %arg0, %c16_i32 : i32
    %36 = tpu.iota {dimensions = array<i32: 0>} : vector<16x1xi32>
    %37 = vector.broadcast %35 : i32 to vector<16x1xi32>
    %38 = arith.addi %37, %36 : vector<16x1xi32>
    %c2_i32 = arith.constant 2 : i32
    %39 = vector.broadcast %c2_i32 : i32 to vector<16x1xi32>
    %40 = arith.cmpi slt, %38, %39 : vector<16x1xi32>
    %cst_24 = arith.constant 0.000000e+00 : f32
    %41 = vector.broadcast %cst_24 : f32 to vector<16x1xf32>
    %42 = arith.select %40, %34, %41 : vector<16x1xi1>, vector<16x1xf32>
    %c0_25 = arith.constant 0 : index
    %c0_26 = arith.constant 0 : index
    %43 = vector.load %arg11[%c0_25, %c0_26] : memref<1x1xf32, #tpu.memory_space<vmem>>, vector<1x1xf32>
    %cst_27 = arith.constant dense<0.000000e+00> : vector<1xf32>
    %44 = vector.multi_reduction <add>, %42, %cst_27 [0] : vector<16x1xf32> to vector<1xf32>
    %45 = vector.shape_cast %44 : vector<1xf32> to vector<1x1xf32>
    %46 = arith.addf %43, %45 : vector<1x1xf32>
    %c0_28 = arith.constant 0 : index
    %c0_29 = arith.constant 0 : index
    %47 = vector.load %arg11[%c0_28, %c0_29] : memref<1x1xf32, #tpu.memory_space<vmem>>, vector<1x1xf32>
    tpu.vector_store %arg11[%c0_28, %c0_29], %46 {strides = array<i32>} : memref<1x1xf32, #tpu.memory_space<vmem>>, vector<1x1xf32>,
    %c0_30 = arith.constant 0 : index
    %c0_31 = arith.constant 0 : index
    %48 = vector.load %arg11[%c0_30, %c0_31] : memref<1x1xf32, #tpu.memory_space<vmem>>, vector<1x1xf32>
    %cst_32 = arith.constant 5.000000e-01 : f32
    %49 = vector.broadcast %cst_32 : f32 to vector<1x1xf32>
    %50 = arith.mulf %48, %49 : vector<1x1xf32>
    %c0_33 = arith.constant 0 : index
    %c0_34 = arith.constant 0 : index
    %51 = vector.load %arg10[%c0_33, %c0_34] : memref<1x1xf32, #tpu.memory_space<vmem>>, vector<1x1xf32>
    tpu.vector_store %arg10[%c0_33, %c0_34], %50 {strides = array<i32>} : memref<1x1xf32, #tpu.memory_space<vmem>>, vector<1x1xf32>,
    return
  }
  func.func @transform_0(%arg0: i32) -> (i32, i32) {
    %c0_i32 = arith.constant 0 : i32
    %c0_i32_0 = arith.constant 0 : i32
    return %arg0, %c0_i32 : i32, i32
  }
  func.func @transform_1(%arg0: i32) -> (i32, i32) {
    %c0_i32 = arith.constant 0 : i32
    %c0_i32_0 = arith.constant 0 : i32
    %c0_i32_1 = arith.constant 0 : i32
    return %c0_i32, %c0_i32_0 : i32, i32
  }
  func.func @transform_2(%arg0: i32) -> (i32, i32) {
    %c0_i32 = arith.constant 0 : i32
    %c0_i32_0 = arith.constant 0 : i32
    %c0_i32_1 = arith.constant 0 : i32
    return %c0_i32, %c0_i32_0 : i32, i32
  }
  func.func @transform_3(%arg0: i32) -> (i32, i32) {
    %c0_i32 = arith.constant 0 : i32
    %c0_i32_0 = arith.constant 0 : i32
    %c0_i32_1 = arith.constant 0 : i32
    return %c0_i32, %c0_i32_0 : i32, i32
  }
  func.func @transform_4(%arg0: i32) -> (i32, i32) {
    %c0_i32 = arith.constant 0 : i32
    %c0_i32_0 = arith.constant 0 : i32
    %c0_i32_1 = arith.constant 0 : i32
    return %c0_i32, %c0_i32_0 : i32, i32
  }
  func.func @transform_5(%arg0: i32) -> (i32, i32) {
    %c0_i32 = arith.constant 0 : i32
    %c0_i32_0 = arith.constant 0 : i32
    %c0_i32_1 = arith.constant 0 : i32
    return %c0_i32, %c0_i32_0 : i32, i32
  }
  func.func @transform_6(%arg0: i32) -> (i32, i32) {
    %c0_i32 = arith.constant 0 : i32
    %c0_i32_0 = arith.constant 0 : i32
    %c0_i32_1 = arith.constant 0 : i32
    return %c0_i32, %c0_i32_0 : i32, i32
  }
  func.func @transform_7(%arg0: i32) -> (i32, i32) {
    %c0_i32 = arith.constant 0 : i32
    %c0_i32_0 = arith.constant 0 : i32
    %c0_i32_1 = arith.constant 0 : i32
    return %c0_i32, %c0_i32_0 : i32, i32
  }
  func.func @transform_8(%arg0: i32) -> (i32, i32) {
    %c0_i32 = arith.constant 0 : i32
    %c0_i32_0 = arith.constant 0 : i32
    %c0_i32_1 = arith.constant 0 : i32
    return %c0_i32, %c0_i32_0 : i32, i32
  }
  func.func @transform_9(%arg0: i32) -> (i32, i32) {
    %c0_i32 = arith.constant 0 : i32
    %c0_i32_0 = arith.constant 0 : i32
    %c0_i32_1 = arith.constant 0 : i32
    return %c0_i32, %c0_i32_0 : i32, i32
  }
}

</mosaic_0001>

<llo_original>
// kernel: tpu_custom_call.1
$region0: #{tpu_custom_call.1}
  #allocation0 [shape = 'u32[]', space=smem, size = 0x4, offset = 0x4, fixed_abs, tag = 'smem constant byte address 0x4 - core index']
  #allocation1 [shape = 'u32[144,128]{1,0:T(1,128)}', space=vmem, size = 0x12000, scoped, tag = 'internal scratch']
  #allocation2 [shape = 'f32[1,1]{1,0:T(1,128)}', space=vmem, size = 0x200, scoped, tag = 'scratch operand']
  #allocation3 [shape = 'f32[1,1]{1,0:T(1,128)S(1)}', space=vmem, size = 0x200, scoped, tag = 'scoped memory for tpu_custom_call.1']
  %s0 = inlined_call_operand.hbm [shape: bf16[16,1024], index: 0, kind: input, shape index: {}]
  %s1 = inlined_call_operand.hbm [shape: bf16[1024,128], index: 1, kind: input, shape index: {}]
  %s2 = inlined_call_operand.vmem [shape: f32[1,128], index: 2, kind: input, shape index: {}]
  %s3 = inlined_call_operand.hbm [shape: bf16[128,128], index: 3, kind: input, shape index: {}]
  %s4 = inlined_call_operand.vmem [shape: f32[1,128], index: 4, kind: input, shape index: {}]
  %s5 = inlined_call_operand.hbm [shape: bf16[128,128], index: 5, kind: input, shape index: {}]
  %s6 = inlined_call_operand.vmem [shape: f32[1,128], index: 6, kind: input, shape index: {}]
  %s7 = inlined_call_operand.vmem [shape: f32[1,128], index: 7, kind: input, shape index: {}]
  %s8 = inlined_call_operand.<no memory space> [shape: f32[1,1], index: 8, kind: input, shape index: {}]
  %s9 = inlined_call_operand.hbm [shape: f32[1,1], index: 9, kind: output, shape index: {}]
  %s10 = sld [smem:[#allocation0]]
  $region66: #{tpu_custom_call.1} parent=0
    _
  %s12 = ssub.s32 1, %s10
  %s13 = scalar_select 0, %s12, %s10
  %v14 = vstv %s8
  %15 = vst [vmem:[#allocation3] sm:$0x1] %v14
  $region1: #{tpu_custom_call.1} parent=0
    #allocation4 [shape = 'u8[32768]{0}', space=vmem, size = 0x8000, scoped, tag = 'input window, operand 0, single buffered']
    #allocation5 [shape = 's32[1]{0}', space=sflag, size = 0x4, scoped, tag = 'scoped memory for tpu_custom_call.1']
    #allocation6 [shape = 's32[1]{0}', space=sflag, size = 0x4, scoped, tag = 'scoped memory for tpu_custom_call.1']
    #allocation7 [shape = 'u8[262144]{0}', space=vmem, size = 0x40000, scoped, tag = 'input window, operand 1, single buffered']
    #allocation8 [shape = 's32[1]{0}', space=sflag, size = 0x4, scoped, tag = 'scoped memory for tpu_custom_call.1']
    #allocation9 [shape = 'u8[32768]{0}', space=vmem, size = 0x8000, scoped, tag = 'input window, operand 3, single buffered']
    #allocation10 [shape = 'u8[32768]{0}', space=vmem, size = 0x8000, scoped, tag = 'input window, operand 5, single buffered']
    #allocation11 [shape = 's32[1]{0}', space=sflag, size = 0x4, scoped, tag = 'scoped memory for tpu_custom_call.1']
    #allocation12 [shape = 'u8[512]{0}', space=vmem, size = 0x400, scoped, tag = 'output window, operand 0, single buffered']
    %16 = vsyncpa [#allocation5], 0
    %17 = vsyncpa [#allocation8], 0
    %18 = vsyncpa [#allocation11], 0
    %19 = vsyncpa [#allocation6], 0
    // Predicated region
    $region2: #{tpu_custom_call.1} parent=1 // pred_check
      _
    $region3: #{tpu_custom_call.1} parent=1 // pred_check_branch
      %21 = sbr.rel (0) target = $region5
    $region4: #{tpu_custom_call.1} parent=1 // pred_region
      %s23 = ssub.s32 1024, 1024
      %24 = vsyncadd [#allocation5], %s23
      %s25 = sshll.u32 [#allocation4], 4
      %s26 = int_to_ptr.vmem [resolvable:$true] %s25
      %31 = dma.hbm_to_vmem [thread:$0]  %s0, 1024, %s26, [#allocation5], 512, 512, 32
    $region5: #{tpu_custom_call.1} parent=1 // pred_fallthru
      _
    // Predicated region
    $region6: #{tpu_custom_call.1} parent=1 // pred_check
      _
    $region7: #{tpu_custom_call.1} parent=1 // pred_check_branch
      %33 = sbr.rel (0) target = $region9
    $region8: #{tpu_custom_call.1} parent=1 // pred_region
      %s35 = ssub.s32 8192, 8192
      %36 = vsyncadd [#allocation8], %s35
      %s37 = sshll.u32 [#allocation7], 4
      %s38 = int_to_ptr.vmem [resolvable:$true] %s37
      %43 = dma.hbm_to_vmem [thread:$0]  %s1, 8192, %s38, [#allocation8], 64, 64, 4
    $region9: #{tpu_custom_call.1} parent=1 // pred_fallthru
      _
    // Predicated region
    $region10: #{tpu_custom_call.1} parent=1 // pred_check
      _
    $region11: #{tpu_custom_call.1} parent=1 // pred_check_branch
      %45 = sbr.rel (0) target = $region13
    $region12: #{tpu_custom_call.1} parent=1 // pred_region
      _
    $region13: #{tpu_custom_call.1} parent=1 // pred_fallthru
      _
    // Predicated region
    $region14: #{tpu_custom_call.1} parent=1 // pred_check
      _
    $region15: #{tpu_custom_call.1} parent=1 // pred_check_branch
      %47 = sbr.rel (0) target = $region17
    $region16: #{tpu_custom_call.1} parent=1 // pred_region
      %s49 = ssub.s32 1024, 1024
      %50 = vsyncadd [#allocation8], %s49
      %s51 = sshll.u32 [#allocation9], 4
      %s52 = int_to_ptr.vmem [resolvable:$true] %s51
      %57 = dma.hbm_to_vmem [thread:$0]  %s3, 1024, %s52, [#allocation8], 64, 64, 4
    $region17: #{tpu_custom_call.1} parent=1 // pred_fallthru
      _
    // Predicated region
    $region18: #{tpu_custom_call.1} parent=1 // pred_check
      _
    $region19: #{tpu_custom_call.1} parent=1 // pred_check_branch
      %59 = sbr.rel (0) target = $region21
    $region20: #{tpu_custom_call.1} parent=1 // pred_region
      _
    $region21: #{tpu_custom_call.1} parent=1 // pred_fallthru
      _
    // Predicated region
    $region22: #{tpu_custom_call.1} parent=1 // pred_check
      _
    $region23: #{tpu_custom_call.1} parent=1 // pred_check_branch
      %61 = sbr.rel (0) target = $region25
    $region24: #{tpu_custom_call.1} parent=1 // pred_region
      %s63 = ssub.s32 1024, 1024
      %64 = vsyncadd [#allocation11], %s63
      %s65 = sshll.u32 [#allocation10], 4
      %s66 = int_to_ptr.vmem [resolvable:$true] %s65
      %71 = dma.hbm_to_vmem [thread:$0]  %s5, 1024, %s66, [#allocation11], 64, 64, 4
    $region25: #{tpu_custom_call.1} parent=1 // pred_fallthru
      _
    // Predicated region
    $region26: #{tpu_custom_call.1} parent=1 // pred_check
      _
    $region27: #{tpu_custom_call.1} parent=1 // pred_check_branch
      %73 = sbr.rel (0) target = $region29
    $region28: #{tpu_custom_call.1} parent=1 // pred_region
      _
    $region29: #{tpu_custom_call.1} parent=1 // pred_fallthru
      _
    // Predicated region
    $region30: #{tpu_custom_call.1} parent=1 // pred_check
      _
    $region31: #{tpu_custom_call.1} parent=1 // pred_check_branch
      %75 = sbr.rel (0) target = $region33
    $region32: #{tpu_custom_call.1} parent=1 // pred_region
      _
    $region33: #{tpu_custom_call.1} parent=1 // pred_fallthru
      _
    // Predicated region
    $region34: #{tpu_custom_call.1} parent=1 // pred_check
      _
    $region35: #{tpu_custom_call.1} parent=1 // pred_check_branch
      %77 = sbr.rel (0) target = $region37
    $region36: #{tpu_custom_call.1} parent=1 // pred_region
      _
    $region37: #{tpu_custom_call.1} parent=1 // pred_fallthru
      _
    // Predicated region
    $region38: #{tpu_custom_call.1} parent=1 // pred_check
      _
    $region39: #{tpu_custom_call.1} parent=1 // pred_check_branch
      %79 = sbr.rel (0) target = $region41
    $region40: #{tpu_custom_call.1} parent=1 // pred_region
      %80 = dma.done [#allocation5], 1024
    $region41: #{tpu_custom_call.1} parent=1 // pred_fallthru
      _
    // Predicated region
    $region42: #{tpu_custom_call.1} parent=1 // pred_check
      _
    $region43: #{tpu_custom_call.1} parent=1 // pred_check_branch
      %82 = sbr.rel (0) target = $region45
    $region44: #{tpu_custom_call.1} parent=1 // pred_region
      %83 = dma.done [#allocation8], 8192
    $region45: #{tpu_custom_call.1} parent=1 // pred_fallthru
      _
    // Predicated region
    $region46: #{tpu_custom_call.1} parent=1 // pred_check
      _
    $region47: #{tpu_custom_call.1} parent=1 // pred_check_branch
      %85 = sbr.rel (0) target = $region49
    $region48: #{tpu_custom_call.1} parent=1 // pred_region
      %86 = dma.done [#allocation8], 1024
    $region49: #{tpu_custom_call.1} parent=1 // pred_fallthru
      _
    // Predicated region
    $region50: #{tpu_custom_call.1} parent=1 // pred_check
      _
    $region51: #{tpu_custom_call.1} parent=1 // pred_check_branch
      %88 = sbr.rel (0) target = $region53
    $region52: #{tpu_custom_call.1} parent=1 // pred_region
      %89 = dma.done [#allocation11], 1024
    $region53: #{tpu_custom_call.1} parent=1 // pred_fallthru
      _
    %p91 = scmp.eq.s32.totalorder 0, 0
    // Predicated region
    $region54: #{tpu_custom_call.1} parent=1 // pred_check
      %p92 = pneg %p91
    $region55: #{tpu_custom_call.1} parent=1 // pred_check_branch
      %94 = sbr.rel (%p92) target = $region57
    $region56: #{tpu_custom_call.1} parent=1 // pred_region
      %vm95 = vcmask 0
      %96 = vst.msk [vmem:[#allocation2] sm:$0x1] %vm95, 0.0
    $region57: #{tpu_custom_call.1} parent=1 // pred_fallthru
      _
    %v97 = vld [vmem:[#allocation4] sm:$0xff]
    %v98 = vld [vmem:[#allocation4 + $0x8] sm:$0xff]
    %v99 = vld [vmem:[#allocation4 + $0x10] sm:$0xff]
    %v100 = vld [vmem:[#allocation4 + $0x18] sm:$0xff]
    %v101 = vld [vmem:[#allocation4 + $0x20] sm:$0xff]
    %v102 = vld [vmem:[#allocation4 + $0x28] sm:$0xff]
    %v103 = vld [vmem:[#allocation4 + $0x30] sm:$0xff]
    %v104 = vld [vmem:[#allocation4 + $0x38] sm:$0xff]
    %v105 = vld [vmem:[#allocation7] sm:$0xf]
    %v106 = vld [vmem:[#allocation7 + $0x4] sm:$0xf]
    %v107 = vld [vmem:[#allocation7 + $0x8] sm:$0xf]
    %v108 = vld [vmem:[#allocation7 + $0xc] sm:$0xf]
    %v109 = vld [vmem:[#allocation7 + $0x10] sm:$0xf]
    %v110 = vld [vmem:[#allocation7 + $0x14] sm:$0xf]
    %v111 = vld [vmem:[#allocation7 + $0x18] sm:$0xf]
    %v112 = vld [vmem:[#allocation7 + $0x1c] sm:$0xf]
    %v113 = vld [vmem:[#allocation7 + $0x20] sm:$0xf]
    %v114 = vld [vmem:[#allocation7 + $0x24] sm:$0xf]
    %v115 = vld [vmem:[#allocation7 + $0x28] sm:$0xf]
    %v116 = vld [vmem:[#allocation7 + $0x2c] sm:$0xf]
    %v117 = vld [vmem:[#allocation7 + $0x30] sm:$0xf]
    %v118 = vld [vmem:[#allocation7 + $0x34] sm:$0xf]
    %v119 = vld [vmem:[#allocation7 + $0x38] sm:$0xf]
    %v120 = vld [vmem:[#allocation7 + $0x3c] sm:$0xf]
    %v121 = vld [vmem:[#allocation7 + $0x40] sm:$0xf]
    %v122 = vld [vmem:[#allocation7 + $0x44] sm:$0xf]
    %v123 = vld [vmem:[#allocation7 + $0x48] sm:$0xf]
    %v124 = vld [vmem:[#allocation7 + $0x4c] sm:$0xf]
    %v125 = vld [vmem:[#allocation7 + $0x50] sm:$0xf]
    %v126 = vld [vmem:[#allocation7 + $0x54] sm:$0xf]
    %v127 = vld [vmem:[#allocation7 + $0x58] sm:$0xf]
    %v128 = vld [vmem:[#allocation7 + $0x5c] sm:$0xf]
    %v129 = vld [vmem:[#allocation7 + $0x60] sm:$0xf]
    %v130 = vld [vmem:[#allocation7 + $0x64] sm:$0xf]
    %v131 = vld [vmem:[#allocation7 + $0x68] sm:$0xf]
    %v132 = vld [vmem:[#allocation7 + $0x6c] sm:$0xf]
    %v133 = vld [vmem:[#allocation7 + $0x70] sm:$0xf]
    %v134 = vld [vmem:[#allocation7 + $0x74] sm:$0xf]
    %v135 = vld [vmem:[#allocation7 + $0x78] sm:$0xf]
    %v136 = vld [vmem:[#allocation7 + $0x7c] sm:$0xf]
    %v137 = vld [vmem:[#allocation7 + $0x80] sm:$0xf]
    %v138 = vld [vmem:[#allocation7 + $0x84] sm:$0xf]
    %v139 = vld [vmem:[#allocation7 + $0x88] sm:$0xf]
    %v140 = vld [vmem:[#allocation7 + $0x8c] sm:$0xf]
    %v141 = vld [vmem:[#allocation7 + $0x90] sm:$0xf]
    %v142 = vld [vmem:[#allocation7 + $0x94] sm:$0xf]
    %v143 = vld [vmem:[#allocation7 + $0x98] sm:$0xf]
    %v144 = vld [vmem:[#allocation7 + $0x9c] sm:$0xf]
    %v145 = vld [vmem:[#allocation7 + $0xa0] sm:$0xf]
    %v146 = vld [vmem:[#allocation7 + $0xa4] sm:$0xf]
    %v147 = vld [vmem:[#allocation7 + $0xa8] sm:$0xf]
    %v148 = vld [vmem:[#allocation7 + $0xac] sm:$0xf]
    %v149 = vld [vmem:[#allocation7 + $0xb0] sm:$0xf]
    %v150 = vld [vmem:[#allocation7 + $0xb4] sm:$0xf]
    %v151 = vld [vmem:[#allocation7 + $0xb8] sm:$0xf]
    %v152 = vld [vmem:[#allocation7 + $0xbc] sm:$0xf]
    %v153 = vld [vmem:[#allocation7 + $0xc0] sm:$0xf]
    %v154 = vld [vmem:[#allocation7 + $0xc4] sm:$0xf]
    %v155 = vld [vmem:[#allocation7 + $0xc8] sm:$0xf]
    %v156 = vld [vmem:[#allocation7 + $0xcc] sm:$0xf]
    %v157 = vld [vmem:[#allocation7 + $0xd0] sm:$0xf]
    %v158 = vld [vmem:[#allocation7 + $0xd4] sm:$0xf]
    %v159 = vld [vmem:[#allocation7 + $0xd8] sm:$0xf]
    %v160 = vld [vmem:[#allocation7 + $0xdc] sm:$0xf]
    %v161 = vld [vmem:[#allocation7 + $0xe0] sm:$0xf]
    %v162 = vld [vmem:[#allocation7 + $0xe4] sm:$0xf]
    %v163 = vld [vmem:[#allocation7 + $0xe8] sm:$0xf]
    %v164 = vld [vmem:[#allocation7 + $0xec] sm:$0xf]
    %v165 = vld [vmem:[#allocation7 + $0xf0] sm:$0xf]
    %v166 = vld [vmem:[#allocation7 + $0xf4] sm:$0xf]
    %v167 = vld [vmem:[#allocation7 + $0xf8] sm:$0xf]
    %v168 = vld [vmem:[#allocation7 + $0xfc] sm:$0xf]
    %v169 = vld [vmem:[#allocation7 + $0x100] sm:$0xf]
    %v170 = vld [vmem:[#allocation7 + $0x104] sm:$0xf]
    %v171 = vld [vmem:[#allocation7 + $0x108] sm:$0xf]
    %v172 = vld [vmem:[#allocation7 + $0x10c] sm:$0xf]
    %v173 = vld [vmem:[#allocation7 + $0x110] sm:$0xf]
    %v174 = vld [vmem:[#allocation7 + $0x114] sm:$0xf]
    %v175 = vld [vmem:[#allocation7 + $0x118] sm:$0xf]
    %v176 = vld [vmem:[#allocation7 + $0x11c] sm:$0xf]
    %v177 = vld [vmem:[#allocation7 + $0x120] sm:$0xf]
    %v178 = vld [vmem:[#allocation7 + $0x124] sm:$0xf]
    %v179 = vld [vmem:[#allocation7 + $0x128] sm:$0xf]
    %v180 = vld [vmem:[#allocation7 + $0x12c] sm:$0xf]
    %v181 = vld [vmem:[#allocation7 + $0x130] sm:$0xf]
    %v182 = vld [vmem:[#allocation7 + $0x134] sm:$0xf]
    %v183 = vld [vmem:[#allocation7 + $0x138] sm:$0xf]
    %v184 = vld [vmem:[#allocation7 + $0x13c] sm:$0xf]
    %v185 = vld [vmem:[#allocation7 + $0x140] sm:$0xf]
    %v186 = vld [vmem:[#allocation7 + $0x144] sm:$0xf]
    %v187 = vld [vmem:[#allocation7 + $0x148] sm:$0xf]
    %v188 = vld [vmem:[#allocation7 + $0x14c] sm:$0xf]
    %v189 = vld [vmem:[#allocation7 + $0x150] sm:$0xf]
    %v190 = vld [vmem:[#allocation7 + $0x154] sm:$0xf]
    %v191 = vld [vmem:[#allocation7 + $0x158] sm:$0xf]
    %v192 = vld [vmem:[#allocation7 + $0x15c] sm:$0xf]
    %v193 = vld [vmem:[#allocation7 + $0x160] sm:$0xf]
    %v194 = vld [vmem:[#allocation7 + $0x164] sm:$0xf]
    %v195 = vld [vmem:[#allocation7 + $0x168] sm:$0xf]
    %v196 = vld [vmem:[#allocation7 + $0x16c] sm:$0xf]
    %v197 = vld [vmem:[#allocation7 + $0x170] sm:$0xf]
    %v198 = vld [vmem:[#allocation7 + $0x174] sm:$0xf]
    %v199 = vld [vmem:[#allocation7 + $0x178] sm:$0xf]
    %v200 = vld [vmem:[#allocation7 + $0x17c] sm:$0xf]
    %v201 = vld [vmem:[#allocation7 + $0x180] sm:$0xf]
    %v202 = vld [vmem:[#allocation7 + $0x184] sm:$0xf]
    %v203 = vld [vmem:[#allocation7 + $0x188] sm:$0xf]
    %v204 = vld [vmem:[#allocation7 + $0x18c] sm:$0xf]
    %v205 = vld [vmem:[#allocation7 + $0x190] sm:$0xf]
    %v206 = vld [vmem:[#allocation7 + $0x194] sm:$0xf]
    %v207 = vld [vmem:[#allocation7 + $0x198] sm:$0xf]
    %v208 = vld [vmem:[#allocation7 + $0x19c] sm:$0xf]
    %v209 = vld [vmem:[#allocation7 + $0x1a0] sm:$0xf]
    %v210 = vld [vmem:[#allocation7 + $0x1a4] sm:$0xf]
    %v211 = vld [vmem:[#allocation7 + $0x1a8] sm:$0xf]
    %v212 = vld [vmem:[#allocation7 + $0x1ac] sm:$0xf]
    %v213 = vld [vmem:[#allocation7 + $0x1b0] sm:$0xf]
    %v214 = vld [vmem:[#allocation7 + $0x1b4] sm:$0xf]
    %v215 = vld [vmem:[#allocation7 + $0x1b8] sm:$0xf]
    %v216 = vld [vmem:[#allocation7 + $0x1bc] sm:$0xf]
    %v217 = vld [vmem:[#allocation7 + $0x1c0] sm:$0xf]
    %v218 = vld [vmem:[#allocation7 + $0x1c4] sm:$0xf]
    %v219 = vld [vmem:[#allocation7 + $0x1c8] sm:$0xf]
    %v220 = vld [vmem:[#allocation7 + $0x1cc] sm:$0xf]
    %v221 = vld [vmem:[#allocation7 + $0x1d0] sm:$0xf]
    %v222 = vld [vmem:[#allocation7 + $0x1d4] sm:$0xf]
    %v223 = vld [vmem:[#allocation7 + $0x1d8] sm:$0xf]
    %v224 = vld [vmem:[#allocation7 + $0x1dc] sm:$0xf]
    %v225 = vld [vmem:[#allocation7 + $0x1e0] sm:$0xf]
    %v226 = vld [vmem:[#allocation7 + $0x1e4] sm:$0xf]
    %v227 = vld [vmem:[#allocation7 + $0x1e8] sm:$0xf]
    %v228 = vld [vmem:[#allocation7 + $0x1ec] sm:$0xf]
    %v229 = vld [vmem:[#allocation7 + $0x1f0] sm:$0xf]
    %v230 = vld [vmem:[#allocation7 + $0x1f4] sm:$0xf]
    %v231 = vld [vmem:[#allocation7 + $0x1f8] sm:$0xf]
    %v232 = vld [vmem:[#allocation7 + $0x1fc] sm:$0xf]
    %v233 = vld [vmem:[%s2] sm:$0x1]
    %v235 = vlaneseq
    %v236 = vshrl.u32 %v235, 7
    %v237 = vsub.s32 0, %v236
    %v238 = vrot.slane %v233, %v237
    %v248 = vunpack.c.l.b16 %v97
    %v249 = vunpack.c.h.b16 %v97
    %v250 = vunpack.c.l.b16 %v98
    %v251 = vunpack.c.h.b16 %v98
    %v252 = vunpack.c.l.b16 %v99
    %v253 = vunpack.c.h.b16 %v99
    %v254 = vunpack.c.l.b16 %v100
    %v255 = vunpack.c.h.b16 %v100
    %v256 = vunpack.c.l.b16 %v101
    %v257 = vunpack.c.h.b16 %v101
    %v258 = vunpack.c.l.b16 %v102
    %v259 = vunpack.c.h.b16 %v102
    %v260 = vunpack.c.l.b16 %v103
    %v261 = vunpack.c.h.b16 %v103
    %v262 = vunpack.c.l.b16 %v104
    %v263 = vunpack.c.h.b16 %v104
    %v264 = vpack.c.b16 %v256, %v248
    %v265 = vpack.c.b16 %v257, %v249
    %v266 = vpack.c.b16 %v258, %v250
    %v267 = vpack.c.b16 %v259, %v251
    %v268 = vpack.c.b16 %v260, %v252
    %v269 = vpack.c.b16 %v261, %v253
    %v270 = vpack.c.b16 %v262, %v254
    %v271 = vpack.c.b16 %v263, %v255
    %v408 = vunpack.c.l.b16 %v105
    %v409 = vunpack.c.l.b16 %v106
    %v410 = vunpack.c.l.b16 %v107
    %v411 = vunpack.c.l.b16 %v108
    %v412 = vunpack.c.l.b16 %v109
    %v413 = vunpack.c.l.b16 %v110
    %v414 = vunpack.c.l.b16 %v111
    %v415 = vunpack.c.l.b16 %v112
    %v416 = vunpack.c.l.b16 %v113
    %v417 = vunpack.c.l.b16 %v114
    %v418 = vunpack.c.l.b16 %v115
    %v419 = vunpack.c.l.b16 %v116
    %v420 = vunpack.c.l.b16 %v117
    %v421 = vunpack.c.l.b16 %v118
    %v422 = vunpack.c.l.b16 %v119
    %v423 = vunpack.c.l.b16 %v120
    %v424 = vunpack.c.l.b16 %v121
    %v425 = vunpack.c.l.b16 %v122
    %v426 = vunpack.c.l.b16 %v123
    %v427 = vunpack.c.l.b16 %v124
    %v428 = vunpack.c.l.b16 %v125
    %v429 = vunpack.c.l.b16 %v126
    %v430 = vunpack.c.l.b16 %v127
    %v431 = vunpack.c.l.b16 %v128
    %v432 = vunpack.c.l.b16 %v129
    %v433 = vunpack.c.l.b16 %v130
    %v434 = vunpack.c.l.b16 %v131
    %v435 = vunpack.c.l.b16 %v132
    %v436 = vunpack.c.l.b16 %v133
    %v437 = vunpack.c.l.b16 %v134
    %v438 = vunpack.c.l.b16 %v135
    %v439 = vunpack.c.l.b16 %v136
    %v440 = vunpack.c.l.b16 %v137
    %v441 = vunpack.c.l.b16 %v138
    %v442 = vunpack.c.l.b16 %v139
    %v443 = vunpack.c.l.b16 %v140
    %v444 = vunpack.c.l.b16 %v141
    %v445 = vunpack.c.l.b16 %v142
    %v446 = vunpack.c.l.b16 %v143
    %v447 = vunpack.c.l.b16 %v144
    %v448 = vunpack.c.l.b16 %v145
    %v449 = vunpack.c.l.b16 %v146
    %v450 = vunpack.c.l.b16 %v147
    %v451 = vunpack.c.l.b16 %v148
    %v452 = vunpack.c.l.b16 %v149
    %v453 = vunpack.c.l.b16 %v150
    %v454 = vunpack.c.l.b16 %v151
    %v455 = vunpack.c.l.b16 %v152
    %v456 = vunpack.c.l.b16 %v153
    %v457 = vunpack.c.l.b16 %v154
    %v458 = vunpack.c.l.b16 %v155
    %v459 = vunpack.c.l.b16 %v156
    %v460 = vunpack.c.l.b16 %v157
    %v461 = vunpack.c.l.b16 %v158
    %v462 = vunpack.c.l.b16 %v159
    %v463 = vunpack.c.l.b16 %v160
    %v464 = vunpack.c.l.b16 %v161
    %v465 = vunpack.c.l.b16 %v162
    %v466 = vunpack.c.l.b16 %v163
    %v467 = vunpack.c.l.b16 %v164
    %v468 = vunpack.c.l.b16 %v165
    %v469 = vunpack.c.l.b16 %v166
    %v470 = vunpack.c.l.b16 %v167
    %v471 = vunpack.c.l.b16 %v168
    %v472 = vunpack.c.l.b16 %v169
    %v473 = vunpack.c.l.b16 %v170
    %v474 = vunpack.c.l.b16 %v171
    %v475 = vunpack.c.l.b16 %v172
    %v476 = vunpack.c.l.b16 %v173
    %v477 = vunpack.c.l.b16 %v174
    %v478 = vunpack.c.l.b16 %v175
    %v479 = vunpack.c.l.b16 %v176
    %v480 = vunpack.c.l.b16 %v177
    %v481 = vunpack.c.l.b16 %v178
    %v482 = vunpack.c.l.b16 %v179
    %v483 = vunpack.c.l.b16 %v180
    %v484 = vunpack.c.l.b16 %v181
    %v485 = vunpack.c.l.b16 %v182
    %v486 = vunpack.c.l.b16 %v183
    %v487 = vunpack.c.l.b16 %v184
    %v488 = vunpack.c.l.b16 %v185
    %v489 = vunpack.c.l.b16 %v186
    %v490 = vunpack.c.l.b16 %v187
    %v491 = vunpack.c.l.b16 %v188
    %v492 = vunpack.c.l.b16 %v189
    %v493 = vunpack.c.l.b16 %v190
    %v494 = vunpack.c.l.b16 %v191
    %v495 = vunpack.c.l.b16 %v192
    %v496 = vunpack.c.l.b16 %v193
    %v497 = vunpack.c.l.b16 %v194
    %v498 = vunpack.c.l.b16 %v195
    %v499 = vunpack.c.l.b16 %v196
    %v500 = vunpack.c.l.b16 %v197
    %v501 = vunpack.c.l.b16 %v198
    %v502 = vunpack.c.l.b16 %v199
    %v503 = vunpack.c.l.b16 %v200
    %v504 = vunpack.c.l.b16 %v201
    %v505 = vunpack.c.l.b16 %v202
    %v506 = vunpack.c.l.b16 %v203
    %v507 = vunpack.c.l.b16 %v204
    %v508 = vunpack.c.l.b16 %v205
    %v509 = vunpack.c.l.b16 %v206
    %v510 = vunpack.c.l.b16 %v207
    %v511 = vunpack.c.l.b16 %v208
    %v512 = vunpack.c.l.b16 %v209
    %v513 = vunpack.c.l.b16 %v210
    %v514 = vunpack.c.l.b16 %v211
    %v515 = vunpack.c.l.b16 %v212
    %v516 = vunpack.c.l.b16 %v213
    %v517 = vunpack.c.l.b16 %v214
    %v518 = vunpack.c.l.b16 %v215
    %v519 = vunpack.c.l.b16 %v216
    %v520 = vunpack.c.l.b16 %v217
    %v521 = vunpack.c.l.b16 %v218
    %v522 = vunpack.c.l.b16 %v219
    %v523 = vunpack.c.l.b16 %v220
    %v524 = vunpack.c.l.b16 %v221
    %v525 = vunpack.c.l.b16 %v222
    %v526 = vunpack.c.l.b16 %v223
    %v527 = vunpack.c.l.b16 %v224
    %v528 = vunpack.c.l.b16 %v225
    %v529 = vunpack.c.l.b16 %v226
    %v530 = vunpack.c.l.b16 %v227
    %v531 = vunpack.c.l.b16 %v228
    %v532 = vunpack.c.l.b16 %v229
    %v533 = vunpack.c.l.b16 %v230
    %v534 = vunpack.c.l.b16 %v231
    %v535 = vunpack.c.l.b16 %v232
    %v536 = vpack.c.b16 %v409, %v408
    %v537 = vpack.c.b16 %v411, %v410
    %v538 = vpack.c.b16 %v413, %v412
    %v539 = vpack.c.b16 %v415, %v414
    %v540 = vpack.c.b16 %v417, %v416
    %v541 = vpack.c.b16 %v419, %v418
    %v542 = vpack.c.b16 %v421, %v420
    %v543 = vpack.c.b16 %v423, %v422
    %v544 = vpack.c.b16 %v425, %v424
    %v545 = vpack.c.b16 %v427, %v426
    %v546 = vpack.c.b16 %v429, %v428
    %v547 = vpack.c.b16 %v431, %v430
    %v548 = vpack.c.b16 %v433, %v432
    %v549 = vpack.c.b16 %v435, %v434
    %v550 = vpack.c.b16 %v437, %v436
    %v551 = vpack.c.b16 %v439, %v438
    %v552 = vpack.c.b16 %v441, %v440
    %v553 = vpack.c.b16 %v443, %v442
    %v554 = vpack.c.b16 %v445, %v444
    %v555 = vpack.c.b16 %v447, %v446
    %v556 = vpack.c.b16 %v449, %v448
    %v557 = vpack.c.b16 %v451, %v450
    %v558 = vpack.c.b16 %v453, %v452
    %v559 = vpack.c.b16 %v455, %v454
    %v560 = vpack.c.b16 %v457, %v456
    %v561 = vpack.c.b16 %v459, %v458
    %v562 = vpack.c.b16 %v461, %v460
    %v563 = vpack.c.b16 %v463, %v462
    %v564 = vpack.c.b16 %v465, %v464
    %v565 = vpack.c.b16 %v467, %v466
    %v566 = vpack.c.b16 %v469, %v468
    %v567 = vpack.c.b16 %v471, %v470
    %v568 = vpack.c.b16 %v473, %v472
    %v569 = vpack.c.b16 %v475, %v474
    %v570 = vpack.c.b16 %v477, %v476
    %v571 = vpack.c.b16 %v479, %v478
    %v572 = vpack.c.b16 %v481, %v480
    %v573 = vpack.c.b16 %v483, %v482
    %v574 = vpack.c.b16 %v485, %v484
    %v575 = vpack.c.b16 %v487, %v486
    %v576 = vpack.c.b16 %v489, %v488
    %v577 = vpack.c.b16 %v491, %v490
    %v578 = vpack.c.b16 %v493, %v492
    %v579 = vpack.c.b16 %v495, %v494
    %v580 = vpack.c.b16 %v497, %v496
    %v581 = vpack.c.b16 %v499, %v498
    %v582 = vpack.c.b16 %v501, %v500
    %v583 = vpack.c.b16 %v503, %v502
    %v584 = vpack.c.b16 %v505, %v504
    %v585 = vpack.c.b16 %v507, %v506
    %v586 = vpack.c.b16 %v509, %v508
    %v587 = vpack.c.b16 %v511, %v510
    %v588 = vpack.c.b16 %v513, %v512
    %v589 = vpack.c.b16 %v515, %v514
    %v590 = vpack.c.b16 %v517, %v516
    %v591 = vpack.c.b16 %v519, %v518
    %v592 = vpack.c.b16 %v521, %v520
    %v593 = vpack.c.b16 %v523, %v522
    %v594 = vpack.c.b16 %v525, %v524
    %v595 = vpack.c.b16 %v527, %v526
    %v596 = vpack.c.b16 %v529, %v528
    %v597 = vpack.c.b16 %v531, %v530
    %v598 = vpack.c.b16 %v533, %v532
    %v599 = vpack.c.b16 %v535, %v534
    %664 = vmatprep.subr.bf16.mxu0 0
    %665 = vmatpush1.bf16.msra.mxu0 %v536
    %666 = vmatprep.subr.bf16.mxu0 0
    %667 = vmatpush1.bf16.msra.mxu0 %v537
    %668 = vmatprep.subr.bf16.mxu0 0
    %669 = vmatpush1.bf16.msra.mxu0 %v538
    %670 = vmatprep.subr.bf16.mxu0 0
    %671 = vmatpush1.bf16.msra.mxu0 %v539
    %672 = vmatprep.subr.bf16.mxu0 0
    %673 = vmatpush1.bf16.msra.mxu0 %v540
    %674 = vmatprep.subr.bf16.mxu0 0
    %675 = vmatpush1.bf16.msra.mxu0 %v541
    %676 = vmatprep.subr.bf16.mxu0 0
    %677 = vmatpush1.bf16.msra.mxu0 %v542
    %678 = vmatprep.subr.bf16.mxu0 0
    %679 = vmatpush1.bf16.msra.mxu0 %v543
    %680 = vmatprep.subr.bf16.mxu0 0
    %681 = vmatpush1.bf16.msra.mxu0 %v544
    %682 = vmatprep.subr.bf16.mxu0 0
    %683 = vmatpush1.bf16.msra.mxu0 %v545
    %684 = vmatprep.subr.bf16.mxu0 0
    %685 = vmatpush1.bf16.msra.mxu0 %v546
    %686 = vmatprep.subr.bf16.mxu0 0
    %687 = vmatpush1.bf16.msra.mxu0 %v547
    %688 = vmatprep.subr.bf16.mxu0 0
    %689 = vmatpush1.bf16.msra.mxu0 %v548
    %690 = vmatprep.subr.bf16.mxu0 0
    %691 = vmatpush1.bf16.msra.mxu0 %v549
    %692 = vmatprep.subr.bf16.mxu0 0
    %693 = vmatpush1.bf16.msra.mxu0 %v550
    %694 = vmatprep.subr.bf16.mxu0 0
    %695 = vmatpush1.bf16.msra.mxu0 %v551
    %696 = vmatprep.mubr.bf16.mxu0 %v265
    %697 = vmatmul.mubr.bf16.gmra.mrb[0].mxu0 %v264
    %v698 = vpop.f32.mrb[0].mxu0
    %v699 = vadd.f32 %v238, %v698
    %v700 = vpop.f32.mrb[0].mxu0
    %v701 = vpop.f32.mrb[0].mxu0
    %v702 = vadd.f32 %v238, %v701
    %v703 = vpop.f32.mrb[0].mxu0
    %704 = vdwg.mxu0
    %705 = vmatprep.subr.bf16.mxu0 0
    %706 = vmatpush1.bf16.msra.mxu0 %v552
    %707 = vmatprep.subr.bf16.mxu0 0
    %708 = vmatpush1.bf16.msra.mxu0 %v553
    %709 = vmatprep.subr.bf16.mxu0 0
    %710 = vmatpush1.bf16.msra.mxu0 %v554
    %711 = vmatprep.subr.bf16.mxu0 0
    %712 = vmatpush1.bf16.msra.mxu0 %v555
    %713 = vmatprep.subr.bf16.mxu0 0
    %714 = vmatpush1.bf16.msra.mxu0 %v556
    %715 = vmatprep.subr.bf16.mxu0 0
    %716 = vmatpush1.bf16.msra.mxu0 %v557
    %717 = vmatprep.subr.bf16.mxu0 0
    %718 = vmatpush1.bf16.msra.mxu0 %v558
    %719 = vmatprep.subr.bf16.mxu0 0
    %720 = vmatpush1.bf16.msra.mxu0 %v559
    %721 = vmatprep.subr.bf16.mxu0 0
    %722 = vmatpush1.bf16.msra.mxu0 %v560
    %723 = vmatprep.subr.bf16.mxu0 0
    %724 = vmatpush1.bf16.msra.mxu0 %v561
    %725 = vmatprep.subr.bf16.mxu0 0
    %726 = vmatpush1.bf16.msra.mxu0 %v562
    %727 = vmatprep.subr.bf16.mxu0 0
    %728 = vmatpush1.bf16.msra.mxu0 %v563
    %729 = vmatprep.subr.bf16.mxu0 0
    %730 = vmatpush1.bf16.msra.mxu0 %v564
    %731 = vmatprep.subr.bf16.mxu0 0
    %732 = vmatpush1.bf16.msra.mxu0 %v565
    %733 = vmatprep.subr.bf16.mxu0 0
    %734 = vmatpush1.bf16.msra.mxu0 %v566
    %735 = vmatprep.subr.bf16.mxu0 0
    %736 = vmatpush1.bf16.msra.mxu0 %v567
    %737 = vmatprep.mubr.bf16.mxu0 %v267
    %738 = vmatmul.mubr.bf16.gmra.mrb[0].mxu0 %v266
    %v739 = vpop.f32.mrb[0].mxu0
    %v740 = vadd.f32 %v699, %v739
    %v741 = vpop.f32.mrb[0].mxu0
    %v742 = vpop.f32.mrb[0].mxu0
    %v743 = vadd.f32 %v702, %v742
    %v744 = vpop.f32.mrb[0].mxu0
    %745 = vdwg.mxu0
    %746 = vmatprep.subr.bf16.mxu0 0
    %747 = vmatpush1.bf16.msra.mxu0 %v568
    %748 = vmatprep.subr.bf16.mxu0 0
    %749 = vmatpush1.bf16.msra.mxu0 %v569
    %750 = vmatprep.subr.bf16.mxu0 0
    %751 = vmatpush1.bf16.msra.mxu0 %v570
    %752 = vmatprep.subr.bf16.mxu0 0
    %753 = vmatpush1.bf16.msra.mxu0 %v571
    %754 = vmatprep.subr.bf16.mxu0 0
    %755 = vmatpush1.bf16.msra.mxu0 %v572
    %756 = vmatprep.subr.bf16.mxu0 0
    %757 = vmatpush1.bf16.msra.mxu0 %v573
    %758 = vmatprep.subr.bf16.mxu0 0
    %759 = vmatpush1.bf16.msra.mxu0 %v574
    %760 = vmatprep.subr.bf16.mxu0 0
    %761 = vmatpush1.bf16.msra.mxu0 %v575
    %762 = vmatprep.subr.bf16.mxu0 0
    %763 = vmatpush1.bf16.msra.mxu0 %v576
    %764 = vmatprep.subr.bf16.mxu0 0
    %765 = vmatpush1.bf16.msra.mxu0 %v577
    %766 = vmatprep.subr.bf16.mxu0 0
    %767 = vmatpush1.bf16.msra.mxu0 %v578
    %768 = vmatprep.subr.bf16.mxu0 0
    %769 = vmatpush1.bf16.msra.mxu0 %v579
    %770 = vmatprep.subr.bf16.mxu0 0
    %771 = vmatpush1.bf16.msra.mxu0 %v580
    %772 = vmatprep.subr.bf16.mxu0 0
    %773 = vmatpush1.bf16.msra.mxu0 %v581
    %774 = vmatprep.subr.bf16.mxu0 0
    %775 = vmatpush1.bf16.msra.mxu0 %v582
    %776 = vmatprep.subr.bf16.mxu0 0
    %777 = vmatpush1.bf16.msra.mxu0 %v583
    %778 = vmatprep.mubr.bf16.mxu0 %v269
    %779 = vmatmul.mubr.bf16.gmra.mrb[0].mxu0 %v268
    %v780 = vpop.f32.mrb[0].mxu0
    %v781 = vadd.f32 %v740, %v780
    %v782 = vpop.f32.mrb[0].mxu0
    %v783 = vpop.f32.mrb[0].mxu0
    %v784 = vadd.f32 %v743, %v783
    %v785 = vpop.f32.mrb[0].mxu0
    %786 = vdwg.mxu0
    %787 = vmatprep.subr.bf16.mxu0 0
    %788 = vmatpush1.bf16.msra.mxu0 %v584
    %789 = vmatprep.subr.bf16.mxu0 0
    %790 = vmatpush1.bf16.msra.mxu0 %v585
    %791 = vmatprep.subr.bf16.mxu0 0
    %792 = vmatpush1.bf16.msra.mxu0 %v586
    %793 = vmatprep.subr.bf16.mxu0 0
    %794 = vmatpush1.bf16.msra.mxu0 %v587
    %795 = vmatprep.subr.bf16.mxu0 0
    %796 = vmatpush1.bf16.msra.mxu0 %v588
    %797 = vmatprep.subr.bf16.mxu0 0
    %798 = vmatpush1.bf16.msra.mxu0 %v589
    %799 = vmatprep.subr.bf16.mxu0 0
    %800 = vmatpush1.bf16.msra.mxu0 %v590
    %801 = vmatprep.subr.bf16.mxu0 0
    %802 = vmatpush1.bf16.msra.mxu0 %v591
    %803 = vmatprep.subr.bf16.mxu0 0
    %804 = vmatpush1.bf16.msra.mxu0 %v592
    %805 = vmatprep.subr.bf16.mxu0 0
    %806 = vmatpush1.bf16.msra.mxu0 %v593
    %807 = vmatprep.subr.bf16.mxu0 0
    %808 = vmatpush1.bf16.msra.mxu0 %v594
    %809 = vmatprep.subr.bf16.mxu0 0
    %810 = vmatpush1.bf16.msra.mxu0 %v595
    %811 = vmatprep.subr.bf16.mxu0 0
    %812 = vmatpush1.bf16.msra.mxu0 %v596
    %813 = vmatprep.subr.bf16.mxu0 0
    %814 = vmatpush1.bf16.msra.mxu0 %v597
    %815 = vmatprep.subr.bf16.mxu0 0
    %816 = vmatpush1.bf16.msra.mxu0 %v598
    %817 = vmatprep.subr.bf16.mxu0 0
    %818 = vmatpush1.bf16.msra.mxu0 %v599
    %819 = vmatprep.mubr.bf16.mxu0 %v271
    %820 = vmatmul.mubr.bf16.gmra.mrb[0].mxu0 %v270
    %v821 = vpop.f32.mrb[0].mxu0
    %v822 = vadd.f32 %v781, %v821
    %v823 = vpop.f32.mrb[0].mxu0
    %v824 = vpop.f32.mrb[0].mxu0
    %v825 = vadd.f32 %v784, %v824
    %v826 = vpop.f32.mrb[0].mxu0
    %827 = vdwg.mxu0
    %v828 = vmax.f32 %v822, 0.0
    %v829 = vmax.f32 %v825, 0.0
    %v830 = vpack.c.bf16 %v829, %v828
    %v831 = vld [vmem:[#allocation9] sm:$0xf]
    %v832 = vld [vmem:[#allocation9 + $0x4] sm:$0xf]
    %v833 = vld [vmem:[#allocation9 + $0x8] sm:$0xf]
    %v834 = vld [vmem:[#allocation9 + $0xc] sm:$0xf]
    %v835 = vld [vmem:[#allocation9 + $0x10] sm:$0xf]
    %v836 = vld [vmem:[#allocation9 + $0x14] sm:$0xf]
    %v837 = vld [vmem:[#allocation9 + $0x18] sm:$0xf]
    %v838 = vld [vmem:[#allocation9 + $0x1c] sm:$0xf]
    %v839 = vld [vmem:[#allocation9 + $0x20] sm:$0xf]
    %v840 = vld [vmem:[#allocation9 + $0x24] sm:$0xf]
    %v841 = vld [vmem:[#allocation9 + $0x28] sm:$0xf]
    %v842 = vld [vmem:[#allocation9 + $0x2c] sm:$0xf]
    %v843 = vld [vmem:[#allocation9 + $0x30] sm:$0xf]
    %v844 = vld [vmem:[#allocation9 + $0x34] sm:$0xf]
    %v845 = vld [vmem:[#allocation9 + $0x38] sm:$0xf]
    %v846 = vld [vmem:[#allocation9 + $0x3c] sm:$0xf]
    %v847 = vld [vmem:[%s4] sm:$0x1]
    %v849 = vlaneseq
    %v850 = vshrl.u32 %v849, 7
    %v851 = vsub.s32 0, %v850
    %v852 = vrot.slane %v847, %v851
    %v870 = vunpack.c.l.b16 %v831
    %v871 = vunpack.c.l.b16 %v832
    %v872 = vunpack.c.l.b16 %v833
    %v873 = vunpack.c.l.b16 %v834
    %v874 = vunpack.c.l.b16 %v835
    %v875 = vunpack.c.l.b16 %v836
    %v876 = vunpack.c.l.b16 %v837
    %v877 = vunpack.c.l.b16 %v838
    %v878 = vunpack.c.l.b16 %v839
    %v879 = vunpack.c.l.b16 %v840
    %v880 = vunpack.c.l.b16 %v841
    %v881 = vunpack.c.l.b16 %v842
    %v882 = vunpack.c.l.b16 %v843
    %v883 = vunpack.c.l.b16 %v844
    %v884 = vunpack.c.l.b16 %v845
    %v885 = vunpack.c.l.b16 %v846
    %v886 = vpack.c.b16 %v871, %v870
    %v887 = vpack.c.b16 %v873, %v872
    %v888 = vpack.c.b16 %v875, %v874
    %v889 = vpack.c.b16 %v877, %v876
    %v890 = vpack.c.b16 %v879, %v878
    %v891 = vpack.c.b16 %v881, %v880
    %v892 = vpack.c.b16 %v883, %v882
    %v893 = vpack.c.b16 %v885, %v884
    %902 = vmatprep.subr.bf16.mxu0 0
    %903 = vmatpush1.bf16.msra.mxu0 %v886
    %904 = vmatprep.subr.bf16.mxu0 0
    %905 = vmatpush1.bf16.msra.mxu0 %v887
    %906 = vmatprep.subr.bf16.mxu0 0
    %907 = vmatpush1.bf16.msra.mxu0 %v888
    %908 = vmatprep.subr.bf16.mxu0 0
    %909 = vmatpush1.bf16.msra.mxu0 %v889
    %910 = vmatprep.subr.bf16.mxu0 0
    %911 = vmatpush1.bf16.msra.mxu0 %v890
    %912 = vmatprep.subr.bf16.mxu0 0
    %913 = vmatpush1.bf16.msra.mxu0 %v891
    %914 = vmatprep.subr.bf16.mxu0 0
    %915 = vmatpush1.bf16.msra.mxu0 %v892
    %916 = vmatprep.subr.bf16.mxu0 0
    %917 = vmatpush1.bf16.msra.mxu0 %v893
    %918 = vmatprep.subr.bf16.mxu0 0
    %919 = vmatpush1.bf16.msra.mxu0 0
    %920 = vmatprep.subr.bf16.mxu0 0
    %921 = vmatpush1.bf16.msra.mxu0 0
    %922 = vmatprep.subr.bf16.mxu0 0
    %923 = vmatpush1.bf16.msra.mxu0 0
    %924 = vmatprep.subr.bf16.mxu0 0
    %925 = vmatpush1.bf16.msra.mxu0 0
    %926 = vmatprep.subr.bf16.mxu0 0
    %927 = vmatpush1.bf16.msra.mxu0 0
    %928 = vmatprep.subr.bf16.mxu0 0
    %929 = vmatpush1.bf16.msra.mxu0 0
    %930 = vmatprep.subr.bf16.mxu0 0
    %931 = vmatpush1.bf16.msra.mxu0 0
    %932 = vmatprep.subr.bf16.mxu0 0
    %933 = vmatpush1.bf16.msra.mxu0 0
    %934 = vmatprep.mubr.bf16.mxu0 0
    %935 = vmatmul.mubr.bf16.gmra.mrb[0].mxu0 %v830
    %v936 = vpop.f32.mrb[0].mxu0
    %v937 = vadd.f32 %v852, %v936
    %v938 = vpop.f32.mrb[0].mxu0
    %v939 = vpop.f32.mrb[0].mxu0
    %v940 = vadd.f32 %v852, %v939
    %v941 = vpop.f32.mrb[0].mxu0
    %942 = vdwg.mxu0
    %v943 = vmax.f32 %v937, 0.0
    %v944 = vmax.f32 %v940, 0.0
    %v945 = vpack.c.bf16 %v944, %v943
    %v946 = vld [vmem:[#allocation10] sm:$0xf]
    %v947 = vld [vmem:[#allocation10 + $0x4] sm:$0xf]
    %v948 = vld [vmem:[#allocation10 + $0x8] sm:$0xf]
    %v949 = vld [vmem:[#allocation10 + $0xc] sm:$0xf]
    %v950 = vld [vmem:[#allocation10 + $0x10] sm:$0xf]
    %v951 = vld [vmem:[#allocation10 + $0x14] sm:$0xf]
    %v952 = vld [vmem:[#allocation10 + $0x18] sm:$0xf]
    %v953 = vld [vmem:[#allocation10 + $0x1c] sm:$0xf]
    %v954 = vld [vmem:[#allocation10 + $0x20] sm:$0xf]
    %v955 = vld [vmem:[#allocation10 + $0x24] sm:$0xf]
    %v956 = vld [vmem:[#allocation10 + $0x28] sm:$0xf]
    %v957 = vld [vmem:[#allocation10 + $0x2c] sm:$0xf]
    %v958 = vld [vmem:[#allocation10 + $0x30] sm:$0xf]
    %v959 = vld [vmem:[#allocation10 + $0x34] sm:$0xf]
    %v960 = vld [vmem:[#allocation10 + $0x38] sm:$0xf]
    %v961 = vld [vmem:[#allocation10 + $0x3c] sm:$0xf]
    %v962 = vld [vmem:[%s6] sm:$0x1]
    %v964 = vlaneseq
    %v965 = vshrl.u32 %v964, 7
    %v966 = vsub.s32 0, %v965
    %v967 = vrot.slane %v962, %v966
    %v985 = vunpack.c.l.b16 %v946
    %v986 = vunpack.c.l.b16 %v947
    %v987 = vunpack.c.l.b16 %v948
    %v988 = vunpack.c.l.b16 %v949
    %v989 = vunpack.c.l.b16 %v950
    %v990 = vunpack.c.l.b16 %v951
    %v991 = vunpack.c.l.b16 %v952
    %v992 = vunpack.c.l.b16 %v953
    %v993 = vunpack.c.l.b16 %v954
    %v994 = vunpack.c.l.b16 %v955
    %v995 = vunpack.c.l.b16 %v956
    %v996 = vunpack.c.l.b16 %v957
    %v997 = vunpack.c.l.b16 %v958
    %v998 = vunpack.c.l.b16 %v959
    %v999 = vunpack.c.l.b16 %v960
    %v1000 = vunpack.c.l.b16 %v961
    %v1001 = vpack.c.b16 %v986, %v985
    %v1002 = vpack.c.b16 %v988, %v987
    %v1003 = vpack.c.b16 %v990, %v989
    %v1004 = vpack.c.b16 %v992, %v991
    %v1005 = vpack.c.b16 %v994, %v993
    %v1006 = vpack.c.b16 %v996, %v995
    %v1007 = vpack.c.b16 %v998, %v997
    %v1008 = vpack.c.b16 %v1000, %v999
    %1017 = vmatprep.subr.bf16.mxu0 0
    %1018 = vmatpush1.bf16.msra.mxu0 %v1001
    %1019 = vmatprep.subr.bf16.mxu0 0
    %1020 = vmatpush1.bf16.msra.mxu0 %v1002
    %1021 = vmatprep.subr.bf16.mxu0 0
    %1022 = vmatpush1.bf16.msra.mxu0 %v1003
    %1023 = vmatprep.subr.bf16.mxu0 0
    %1024 = vmatpush1.bf16.msra.mxu0 %v1004
    %1025 = vmatprep.subr.bf16.mxu0 0
    %1026 = vmatpush1.bf16.msra.mxu0 %v1005
    %1027 = vmatprep.subr.bf16.mxu0 0
    %1028 = vmatpush1.bf16.msra.mxu0 %v1006
    %1029 = vmatprep.subr.bf16.mxu0 0
    %1030 = vmatpush1.bf16.msra.mxu0 %v1007
    %1031 = vmatprep.subr.bf16.mxu0 0
    %1032 = vmatpush1.bf16.msra.mxu0 %v1008
    %1033 = vmatprep.subr.bf16.mxu0 0
    %1034 = vmatpush1.bf16.msra.mxu0 0
    %1035 = vmatprep.subr.bf16.mxu0 0
    %1036 = vmatpush1.bf16.msra.mxu0 0
    %1037 = vmatprep.subr.bf16.mxu0 0
    %1038 = vmatpush1.bf16.msra.mxu0 0
    %1039 = vmatprep.subr.bf16.mxu0 0
    %1040 = vmatpush1.bf16.msra.mxu0 0
    %1041 = vmatprep.subr.bf16.mxu0 0
    %1042 = vmatpush1.bf16.msra.mxu0 0
    %1043 = vmatprep.subr.bf16.mxu0 0
    %1044 = vmatpush1.bf16.msra.mxu0 0
    %1045 = vmatprep.subr.bf16.mxu0 0
    %1046 = vmatpush1.bf16.msra.mxu0 0
    %1047 = vmatprep.subr.bf16.mxu0 0
    %1048 = vmatpush1.bf16.msra.mxu0 0
    %1049 = vmatprep.mubr.bf16.mxu0 0
    %1050 = vmatmul.mubr.bf16.gmra.mrb[0].mxu0 %v945
    %v1051 = vpop.f32.mrb[0].mxu0
    %v1052 = vadd.f32 %v967, %v1051
    %v1053 = vpop.f32.mrb[0].mxu0
    %v1054 = vpop.f32.mrb[0].mxu0
    %v1055 = vadd.f32 %v967, %v1054
    %v1056 = vpop.f32.mrb[0].mxu0
    %1057 = vdwg.mxu0
    %v1058 = vmax.f32 %v1052, 0.0
    %v1059 = vmax.f32 %v1055, 0.0
    %v1060 = vld [vmem:[%s7] sm:$0x1]
    %v1062 = vlaneseq
    %v1063 = vshrl.u32 %v1062, 7
    %v1064 = vsub.s32 0, %v1063
    %v1065 = vrot.slane %v1060, %v1064
    %v1067 = vmul.f32 %v1058, %v1065
    %v1068 = vmul.f32 %v1059, %v1065
    %1069 = vadd.xlane.f32.xlu0 %v1067
    %v1070 = vpop.xlane.xlu0 %1069
    %1071 = vadd.xlane.f32.xlu0 %v1068
    %v1072 = vpop.xlane.xlu0 %1071
    %v1073 = vld [vmem:[#allocation3] sm:$0x1]
    %v1075 = vlaneseq
    %v1076 = vshrl.u32 %v1075, 7
    %v1077 = vsub.s32 0, %v1076
    %v1078 = vrot.slane %v1073, %v1077
    %v1080 = vadd.f32 %v1070, %v1078
    %v1081 = vadd.f32 %v1072, %v1078
    %s1082 = smul.u32 0, 16
    %v1083 = vlaneseq
    %v1084 = vshrl.u32 %v1083, 7
    %v1085 = vadd.s32 %v1084, 8
    %v1086 = vstv %s1082
    %v1087 = vadd.s32 %v1086, %v1084
    %v1088 = vadd.s32 %v1086, %v1085
    %vm1089 = vcmp.lt.s32.totalorder %v1087, 2
    %vm1090 = vcmp.lt.s32.totalorder %v1088, 2
    %v1091 = vsel %vm1089, %v1080, 0.0
    %v1092 = vsel %vm1090, %v1081, 0.0
    %v1093 = vld [vmem:[#allocation2] sm:$0x1]
    %vm1094 = vcmask 7168
    %v1095 = vsel %vm1094, %v1091, 0.0
    %v1096 = vsel %vm1094, %v1092, 0.0
    %v1097 = vadd.f32 %v1095, %v1096
    %v1098 = vrot.slane %v1097, 4
    %v1099 = vadd.f32 %v1097, %v1098
    %v1100 = vrot.slane %v1099, 2
    %v1101 = vadd.f32 %v1099, %v1100
    %v1102 = vrot.slane %v1101, 1
    %v1103 = vadd.f32 %v1101, %v1102
    %v1104 = vadd.f32 %v1093, %v1103
    %vm1105 = vcmask 0
    %1106 = vst.msk [vmem:[#allocation2] sm:$0x1] %vm1105, %v1104
    %v1107 = vld [vmem:[#allocation2] sm:$0x1]
    %v1108 = vmul.f32 %v1107, 0.5
    %1109 = vst.msk [vmem:[#allocation12] sm:$0x1] %vm1105, %v1108
    // Predicated region
    $region58: #{tpu_custom_call.1} parent=1 // pred_check
      _
    $region59: #{tpu_custom_call.1} parent=1 // pred_check_branch
      %1111 = sbr.rel (0) target = $region61
    $region60: #{tpu_custom_call.1} parent=1 // pred_region
      %s1113 = ssub.s32 16, 16
      %1114 = vsyncadd [#allocation6], %s1113
      %s1116 = sshll.u32 [#allocation12], 4
      %s1117 = int_to_ptr.vmem [resolvable:$true] %s1116
      %1119 = dma.vmem_to_hbm [thread:$0]  %s1117, 16, %s9, [#allocation6]
    $region61: #{tpu_custom_call.1} parent=1 // pred_fallthru
      _
    // Predicated region
    $region62: #{tpu_custom_call.1} parent=1 // pred_check
      _
    $region63: #{tpu_custom_call.1} parent=1 // pred_check_branch
      %1121 = sbr.rel (0) target = $region65
    $region64: #{tpu_custom_call.1} parent=1 // pred_region
      %1122 = dma.done [#allocation6], 16
    $region65: #{tpu_custom_call.1} parent=1 // pred_fallthru
      _
    %1123 = vsyncpa [#allocation5], 1
    %1124 = vsyncpa [#allocation8], 1
    %1125 = vsyncpa [#allocation11], 1
    %1126 = vsyncpa [#allocation6], 1

</llo_original>
